<compile_context>
chip_gen: v6e
topology: v6e:2x2x1
jax: 0.10.0
libtpu: 0.0.40
codegen_flags: <defaults>
</compile_context>

<pallas_src>
import jax
import jax.numpy as jnp
from jax.experimental import pallas as pl
from jax.experimental.pallas import tpu as pltpu


def mlp_kernel(x_ref, w1_ref, b1_ref, w2_ref, b2_ref, o_ref):
    # Hidden layer: f32 matmul with f32 accumulation (exact nn.Linear semantics).
    h = jnp.dot(x_ref[...], w1_ref[...], preferred_element_type=jnp.float32)
    h = jnp.maximum(h + b1_ref[...], 0.0)  # bias add + ReLU on the VPU
    # Dropout is identity at inference time -> omitted.
    y = jnp.dot(h, w2_ref[...], preferred_element_type=jnp.float32)
    o_ref[...] = (y + b2_ref[...]).astype(o_ref.dtype)


def _pick_block_m(B):
    """One grid step for small batches / single-TC chips; two parallel steps for
    large batches (keeps both v7x TensorCores busy without extra step overhead).
    Always returns a block that divides B exactly so no padding copy is needed."""
    if B >= 256 and B % 2 == 0:
        half = B // 2
        if half % 8 == 0:          # (8, 128) sublane rule: block_m % 8 == 0 or == B
            return half
    return B                       # single step; block equals full batch dim


def mlp_classifier(x, w1, b1, w2, b2, *, block_m=None):
    """x: (B, D) f32; w1: (D, H); b1: (H,); w2: (H, C); b2: (C,). Returns (B, C) f32."""
    B, D = x.shape
    H = w1.shape[1]
    C = w2.shape[1]

    if block_m is None:
        block_m = _pick_block_m(B)
    assert B % block_m == 0, "block_m must divide B (avoids a padding copy of x)"
    assert block_m == B or block_m % 8 == 0, "block_m must be a multiple of 8 or equal B"

    b1_2d = b1.reshape(1, H).astype(jnp.float32)
    b2_2d = b2.reshape(1, C).astype(jnp.float32)

    itemsize = 4  # f32
    cost = pl.CostEstimate(
        flops=2 * B * (D * H + H * C),
        transcendentals=0,
        bytes_accessed=itemsize * (B * D + B * C + D * H + H + H * C + C),
    )

    out = pl.pallas_call(
        mlp_kernel,
        out_shape=jax.ShapeDtypeStruct((B, C), jnp.float32),
        grid=(B // block_m,),
        in_specs=[
            pl.BlockSpec((block_m, D), lambda i: (i, 0)),  # x tile: streamed per step
            pl.BlockSpec((D, H), lambda i: (0, 0)),        # W1: VMEM-resident
            pl.BlockSpec((1, H), lambda i: (0, 0)),        # b1: VMEM-resident
            pl.BlockSpec((H, C), lambda i: (0, 0)),        # W2: VMEM-resident
            pl.BlockSpec((1, C), lambda i: (0, 0)),        # b2: VMEM-resident
        ],
        out_specs=pl.BlockSpec((block_m, C), lambda i: (i, 0)),
        compiler_params=pltpu.CompilerParams(
            dimension_semantics=("parallel",)),
        cost_estimate=cost,
    )(x.astype(jnp.float32), w1.astype(jnp.float32), b1_2d,
      w2.astype(jnp.float32), b2_2d)

    return out


def _torch_style_linear_init(key, fan_in, fan_out):
    """Deterministic init matching nn.Linear's default scheme (uniform +/- 1/sqrt(fan_in))."""
    kw, kb = jax.random.split(key)
    bound = 1.0 / jnp.sqrt(fan_in)
    # Stored as (in_features, out_features) so the kernel does x @ W (PyTorch stores W^T).
    w = jax.random.uniform(kw, (fan_in, fan_out), jnp.float32, -bound, bound)
    b = jax.random.uniform(kb, (fan_out,), jnp.float32, -bound, bound)
    return w, b


if __name__ == "__main__":
    # MLPClassifier(input_dim=32, hidden_dim=64, num_classes=1), eval mode.
    # Small batch -> single grid step (block_m == B), no padding, no extra passes.
    batch, input_dim, hidden_dim, num_classes = 16, 32, 64, 1

    key = jax.random.PRNGKey(0)
    kx, k1, k2 = jax.random.split(key, 3)

    x = jax.random.normal(kx, (batch, input_dim), jnp.float32)
    w1, b1 = _torch_style_linear_init(k1, input_dim, hidden_dim)
    w2, b2 = _torch_style_linear_init(k2, hidden_dim, num_classes)

    out = mlp_classifier(x, w1, b1, w2, b2)
    jax.block_until_ready(out)
    assert out.shape == (batch, num_classes)

    # Full-precision reference (original PyTorch semantics in eval mode).
    ref_f32 = jnp.maximum(x @ w1 + b1, 0.0) @ w2 + b2
    assert jnp.allclose(out, ref_f32, atol=1e-4, rtol=1e-4), (
        jnp.max(jnp.abs(out - ref_f32)))

    # Also exercise the multi-step (2 parallel tiles) path with a larger batch.
    big_batch = 512
    xb = jax.random.normal(kx, (big_batch, input_dim), jnp.float32)
    out_big = mlp_classifier(xb, w1, b1, w2, b2)
    jax.block_until_ready(out_big)
    assert out_big.shape == (big_batch, num_classes)
    ref_big = jnp.maximum(xb @ w1 + b1, 0.0) @ w2 + b2
    assert jnp.allclose(out_big, ref_big, atol=1e-4, rtol=1e-4)

    print("KERNEL_OK")
</pallas_src>

<mosaic_0001>
module attributes {stable_mosaic.version = 11 : i64} {
  func.func @mlp_kernel(%arg0: i32, %arg1: memref<16x32xf32, #tpu.memory_space<vmem>>, %arg2: memref<32x64xf32, #tpu.memory_space<vmem>>, %arg3: memref<1x64xf32, #tpu.memory_space<vmem>>, %arg4: memref<64x1xf32, #tpu.memory_space<vmem>>, %arg5: memref<1x1xf32, #tpu.memory_space<vmem>>, %arg6: memref<16x1xf32, #tpu.memory_space<vmem>>) attributes {dimension_semantics = [#tpu.dimension_semantics<parallel>], iteration_bounds = array<i64: 1>, scalar_prefetch = 0 : i64, scratch_operands = 0 : i64, tpu.core_type = #tpu.core_type<tc>, window_params = [{transform_indices = @transform_0, window_bounds = array<i64: 16, 32>}, {pipeline_mode = #tpu.pipeline_mode<synchronous>, transform_indices = @transform_1, window_bounds = array<i64: 32, 64>}, {pipeline_mode = #tpu.pipeline_mode<synchronous>, transform_indices = @transform_2, window_bounds = array<i64: 1, 64>}, {pipeline_mode = #tpu.pipeline_mode<synchronous>, transform_indices = @transform_3, window_bounds = array<i64: 64, 1>}, {pipeline_mode = #tpu.pipeline_mode<synchronous>, transform_indices = @transform_4, window_bounds = array<i64: 1, 1>}, {transform_indices = @transform_5, window_bounds = array<i64: 16, 1>}]} {
    %c0 = arith.constant 0 : index
    %c0_0 = arith.constant 0 : index
    %0 = vector.load %arg1[%c0, %c0_0] : memref<16x32xf32, #tpu.memory_space<vmem>>, vector<16x32xf32>
    %c0_1 = arith.constant 0 : index
    %c0_2 = arith.constant 0 : index
    %1 = vector.load %arg2[%c0_1, %c0_2] : memref<32x64xf32, #tpu.memory_space<vmem>>, vector<32x64xf32>
    %cst = arith.constant dense<0.000000e+00> : vector<16x64xf32>
    %2 = tpu.matmul %0, %1, %cst {dimension_numbers = #tpu.dot_dimension_numbers<[1], [0], [0], [1], [0, 0, 1, 1], [], []>} : vector<16x32xf32>, vector<32x64xf32>, vector<16x64xf32> -> vector<16x64xf32>
    %c0_3 = arith.constant 0 : index
    %c0_4 = arith.constant 0 : index
    %3 = vector.load %arg3[%c0_3, %c0_4] : memref<1x64xf32, #tpu.memory_space<vmem>>, vector<1x64xf32>
    %4 = vector.broadcast %3 : vector<1x64xf32> to vector<16x64xf32>
    %5 = arith.addf %2, %4 : vector<16x64xf32>
    %cst_5 = arith.constant 0.000000e+00 : f32
    %6 = vector.broadcast %cst_5 : f32 to vector<16x64xf32>
    %7 = arith.maximumf %5, %6 : vector<16x64xf32>
    %c0_6 = arith.constant 0 : index
    %c0_7 = arith.constant 0 : index
    %8 = vector.load %arg4[%c0_6, %c0_7] : memref<64x1xf32, #tpu.memory_space<vmem>>, vector<64x1xf32>
    %cst_8 = arith.constant dense<0.000000e+00> : vector<16x1xf32>
    %9 = tpu.matmul %7, %8, %cst_8 {dimension_numbers = #tpu.dot_dimension_numbers<[1], [0], [0], [1], [0, 0, 1, 1], [], []>} : vector<16x64xf32>, vector<64x1xf32>, vector<16x1xf32> -> vector<16x1xf32>
    %c0_9 = arith.constant 0 : index
    %c0_10 = arith.constant 0 : index
    %10 = vector.load %arg5[%c0_9, %c0_10] : memref<1x1xf32, #tpu.memory_space<vmem>>, vector<1x1xf32>
    %11 = vector.broadcast %10 : vector<1x1xf32> to vector<16x1xf32>
    %12 = arith.addf %9, %11 : vector<16x1xf32>
    %c0_11 = arith.constant 0 : index
    %c0_12 = arith.constant 0 : index
    %13 = vector.load %arg6[%c0_11, %c0_12] : memref<16x1xf32, #tpu.memory_space<vmem>>, vector<16x1xf32>
    tpu.vector_store %arg6[%c0_11, %c0_12], %12 {strides = array<i32>} : memref<16x1xf32, #tpu.memory_space<vmem>>, vector<16x1xf32>,
    return
  }
  func.func @transform_0(%arg0: i32) -> (i32, i32) {
    %c0_i32 = arith.constant 0 : i32
    %c0_i32_0 = arith.constant 0 : i32
    return %arg0, %c0_i32 : i32, i32
  }
  func.func @transform_1(%arg0: i32) -> (i32, i32) {
    %c0_i32 = arith.constant 0 : i32
    %c0_i32_0 = arith.constant 0 : i32
    %c0_i32_1 = arith.constant 0 : i32
    return %c0_i32, %c0_i32_0 : i32, i32
  }
  func.func @transform_2(%arg0: i32) -> (i32, i32) {
    %c0_i32 = arith.constant 0 : i32
    %c0_i32_0 = arith.constant 0 : i32
    %c0_i32_1 = arith.constant 0 : i32
    return %c0_i32, %c0_i32_0 : i32, i32
  }
  func.func @transform_3(%arg0: i32) -> (i32, i32) {
    %c0_i32 = arith.constant 0 : i32
    %c0_i32_0 = arith.constant 0 : i32
    %c0_i32_1 = arith.constant 0 : i32
    return %c0_i32, %c0_i32_0 : i32, i32
  }
  func.func @transform_4(%arg0: i32) -> (i32, i32) {
    %c0_i32 = arith.constant 0 : i32
    %c0_i32_0 = arith.constant 0 : i32
    %c0_i32_1 = arith.constant 0 : i32
    return %c0_i32, %c0_i32_0 : i32, i32
  }
  func.func @transform_5(%arg0: i32) -> (i32, i32) {
    %c0_i32 = arith.constant 0 : i32
    %c0_i32_0 = arith.constant 0 : i32
    return %arg0, %c0_i32 : i32, i32
  }
}

</mosaic_0001>

<llo_original>
// kernel: tpu_custom_call.1
$region0: #{tpu_custom_call.1}
  #allocation0 [shape = 'u32[]', space=smem, size = 0x4, offset = 0x4, fixed_abs, tag = 'smem constant byte address 0x4 - core index']
  #allocation1 [shape = 'u32[144,128]{1,0:T(1,128)}', space=vmem, size = 0x12000, scoped, tag = 'internal scratch']
  #allocation2 [shape = 'f32[1,1]{1,0:T(1,128)S(1)}', space=vmem, size = 0x200, scoped, tag = 'scoped memory for tpu_custom_call.1']
  %s0 = inlined_call_operand.vmem [shape: f32[16,32], index: 0, kind: input, shape index: {}]
  %s1 = inlined_call_operand.vmem [shape: f32[32,64], index: 1, kind: input, shape index: {}]
  %s2 = inlined_call_operand.vmem [shape: f32[1,64], index: 2, kind: input, shape index: {}]
  %s3 = inlined_call_operand.vmem [shape: f32[64,1], index: 3, kind: input, shape index: {}]
  %s4 = inlined_call_operand.<no memory space> [shape: f32[1,1], index: 4, kind: input, shape index: {}]
  %s5 = inlined_call_operand.vmem [shape: f32[16,1], index: 5, kind: output, shape index: {}]
  %s6 = sld [smem:[#allocation0]]
  $region30: #{tpu_custom_call.1} parent=0
    _
  %s8 = ssub.s32 1, %s6
  %s9 = scalar_select 0, %s8, %s6
  %v10 = vstv %s4
  %11 = vst [vmem:[#allocation2] sm:$0x1] %v10
  // Predicated region
  $region2: #{tpu_custom_call.1} parent=0 // pred_check
    _
  $region3: #{tpu_custom_call.1} parent=0 // pred_check_branch
    %13 = sbr.rel (0) target = $region5
  $region4: #{tpu_custom_call.1} parent=0 // pred_region
    _
  $region5: #{tpu_custom_call.1} parent=0 // pred_fallthru
    _
  // Predicated region
  $region6: #{tpu_custom_call.1} parent=0 // pred_check
    _
  $region7: #{tpu_custom_call.1} parent=0 // pred_check_branch
    %15 = sbr.rel (0) target = $region9
  $region8: #{tpu_custom_call.1} parent=0 // pred_region
    _
  $region9: #{tpu_custom_call.1} parent=0 // pred_fallthru
    _
  // Predicated region
  $region10: #{tpu_custom_call.1} parent=0 // pred_check
    _
  $region11: #{tpu_custom_call.1} parent=0 // pred_check_branch
    %17 = sbr.rel (0) target = $region13
  $region12: #{tpu_custom_call.1} parent=0 // pred_region
    _
  $region13: #{tpu_custom_call.1} parent=0 // pred_fallthru
    _
  // Predicated region
  $region14: #{tpu_custom_call.1} parent=0 // pred_check
    _
  $region15: #{tpu_custom_call.1} parent=0 // pred_check_branch
    %19 = sbr.rel (0) target = $region17
  $region16: #{tpu_custom_call.1} parent=0 // pred_region
    _
  $region17: #{tpu_custom_call.1} parent=0 // pred_fallthru
    _
  // Predicated region
  $region18: #{tpu_custom_call.1} parent=0 // pred_check
    _
  $region19: #{tpu_custom_call.1} parent=0 // pred_check_branch
    %21 = sbr.rel (0) target = $region21
  $region20: #{tpu_custom_call.1} parent=0 // pred_region
    _
  $region21: #{tpu_custom_call.1} parent=0 // pred_fallthru
    _
  %v22 = vld [vmem:[%s0] sm:$0xff]
  %v23 = vld [vmem:[%s0 + $0x8] sm:$0xff]
  %v24 = vld [vmem:[%s1] sm:$0xff]
  %v25 = vld [vmem:[%s1 + $0x8] sm:$0xff]
  %v26 = vld [vmem:[%s1 + $0x10] sm:$0xff]
  %v27 = vld [vmem:[%s1 + $0x18] sm:$0xff]
  %v28 = vld [vmem:[%s2] sm:$0x1]
  %v30 = vlaneseq
  %v31 = vshrl.u32 %v30, 7
  %v32 = vsub.s32 0, %v31
  %v33 = vrot.slane %v28, %v32
  %vm35 = vcmask 261120
  %v37 = vsel %vm35, %v22, 0
  %v40 = vsel %vm35, %v23, 0
  %42 = vmatprep.subr.mxu0 0.0
  %43 = vmatpush1.msra.mxu0 0.0
  %44 = vmatprep.subr.mxu0 0.0
  %45 = vmatpush1.msra.mxu0 0.0
  %46 = vmatprep.subr.mxu0 0.0
  %47 = vmatpush1.msra.mxu0 0.0
  %48 = vmatprep.subr.mxu0 0.0
  %49 = vmatpush1.msra.mxu0 0.0
  %50 = vmatprep.subr.mxu0 0.0
  %51 = vmatpush1.msra.mxu0 0.0
  %52 = vmatprep.subr.mxu0 0.0
  %53 = vmatpush1.msra.mxu0 0.0
  %54 = vmatprep.subr.mxu0 0.0
  %55 = vmatpush1.msra.mxu0 0.0
  %56 = vmatprep.subr.mxu0 0.0
  %57 = vmatpush1.msra.mxu0 0.0
  %58 = vmatprep.subr.mxu0 0.0
  %59 = vmatpush1.msra.mxu0 0.0
  %60 = vmatprep.subr.mxu0 0.0
  %61 = vmatpush1.msra.mxu0 0.0
  %62 = vmatprep.subr.mxu0 0.0
  %63 = vmatpush1.msra.mxu0 0.0
  %64 = vmatprep.subr.mxu0 0.0
  %65 = vmatpush1.msra.mxu0 0.0
  %66 = vmatprep.subr.mxu0 0.0
  %67 = vmatpush1.msra.mxu0 %v27
  %68 = vmatprep.subr.mxu0 0.0
  %69 = vmatpush1.msra.mxu0 %v26
  %70 = vmatprep.subr.mxu0 0.0
  %71 = vmatpush1.msra.mxu0 %v25
  %72 = vmatprep.subr.mxu0 0.0
  %73 = vmatpush1.msra.mxu0 %v24
  %74 = vmatprep.subr.mxu0 0.0
  %75 = vmatpush2.msra.mxu0 0.0
  %76 = vmatprep.subr.mxu0 0.0
  %77 = vmatpush2.msra.mxu0 0.0
  %78 = vmatprep.subr.mxu0 0.0
  %79 = vmatpush2.msra.mxu0 0.0
  %80 = vmatprep.subr.mxu0 0.0
  %81 = vmatpush2.msra.mxu0 0.0
  %82 = vmatprep.subr.mxu0 0.0
  %83 = vmatpush2.msra.mxu0 0.0
  %84 = vmatprep.subr.mxu0 0.0
  %85 = vmatpush2.msra.mxu0 0.0
  %86 = vmatprep.subr.mxu0 0.0
  %87 = vmatpush2.msra.mxu0 0.0
  %88 = vmatprep.subr.mxu0 0.0
  %89 = vmatpush2.msra.mxu0 0.0
  %90 = vmatprep.subr.mxu0 0.0
  %91 = vmatpush2.msra.mxu0 0.0
  %92 = vmatprep.subr.mxu0 0.0
  %93 = vmatpush2.msra.mxu0 0.0
  %94 = vmatprep.subr.mxu0 0.0
  %95 = vmatpush2.msra.mxu0 0.0
  %96 = vmatprep.subr.mxu0 0.0
  %97 = vmatpush2.msra.mxu0 0.0
  %98 = vmatprep.subr.mxu0 0.0
  %99 = vmatpush2.msra.mxu0 0.0
  %100 = vmatprep.subr.mxu0 0.0
  %101 = vmatpush2.msra.mxu0 0.0
  %102 = vmatprep.subr.mxu0 0.0
  %103 = vmatpush2.msra.mxu0 0.0
  %104 = vmatprep.subr.mxu0 0.0
  %105 = vmatpush2.msra.mxu0 0.0
  %106 = vmatprep.mubr.f32.mxu0 0.0
  %107 = vmatmul.mubr.f32.gmra.mxu0 %v37
  %v108 = vpop.f32.mrf.mxu0
  %v109 = vadd.f32 %v33, %v108
  %v110 = vpop.f32.mrf.mxu0
  %111 = vmatprep.mubr.f32.mxu0 0.0
  %112 = vmatmul.mubr.f32.gmra.mxu0 %v40
  %v113 = vpop.f32.mrf.mxu0
  %v114 = vadd.f32 %v33, %v113
  %v115 = vpop.f32.mrf.mxu0
  %116 = vdwg.mxu0
  %v117 = vmax.f32 %v109, 0.0
  %v118 = vmax.f32 %v114, 0.0
  %v119 = vld [vmem:[%s3] sm:$0xff]
  %v120 = vld [vmem:[%s3 + $0x8] sm:$0xff]
  %v121 = vld [vmem:[%s3 + $0x10] sm:$0xff]
  %v122 = vld [vmem:[%s3 + $0x18] sm:$0xff]
  %v123 = vld [vmem:[%s3 + $0x20] sm:$0xff]
  %v124 = vld [vmem:[%s3 + $0x28] sm:$0xff]
  %v125 = vld [vmem:[%s3 + $0x30] sm:$0xff]
  %v126 = vld [vmem:[%s3 + $0x38] sm:$0xff]
  %v127 = vld [vmem:[#allocation2] sm:$0x1]
  %v129 = vlaneseq
  %v130 = vshrl.u32 %v129, 7
  %v131 = vsub.s32 0, %v130
  %v132 = vrot.slane %v127, %v131
  %vm134 = vcmask 523264
  %v136 = vsel %vm134, %v117, 0
  %v139 = vsel %vm134, %v118, 0
  %141 = vmatprep.subr.mxu0 0.0
  %142 = vmatpush1.msra.mxu0 0.0
  %143 = vmatprep.subr.mxu0 0.0
  %144 = vmatpush1.msra.mxu0 0.0
  %145 = vmatprep.subr.mxu0 0.0
  %146 = vmatpush1.msra.mxu0 0.0
  %147 = vmatprep.subr.mxu0 0.0
  %148 = vmatpush1.msra.mxu0 0.0
  %149 = vmatprep.subr.mxu0 0.0
  %150 = vmatpush1.msra.mxu0 0.0
  %151 = vmatprep.subr.mxu0 0.0
  %152 = vmatpush1.msra.mxu0 0.0
  %153 = vmatprep.subr.mxu0 0.0
  %154 = vmatpush1.msra.mxu0 0.0
  %155 = vmatprep.subr.mxu0 0.0
  %156 = vmatpush1.msra.mxu0 0.0
  %157 = vmatprep.subr.mxu0 0.0
  %158 = vmatpush1.msra.mxu0 %v126
  %159 = vmatprep.subr.mxu0 0.0
  %160 = vmatpush1.msra.mxu0 %v125
  %161 = vmatprep.subr.mxu0 0.0
  %162 = vmatpush1.msra.mxu0 %v124
  %163 = vmatprep.subr.mxu0 0.0
  %164 = vmatpush1.msra.mxu0 %v123
  %165 = vmatprep.subr.mxu0 0.0
  %166 = vmatpush1.msra.mxu0 %v122
  %167 = vmatprep.subr.mxu0 0.0
  %168 = vmatpush1.msra.mxu0 %v121
  %169 = vmatprep.subr.mxu0 0.0
  %170 = vmatpush1.msra.mxu0 %v120
  %171 = vmatprep.subr.mxu0 0.0
  %172 = vmatpush1.msra.mxu0 %v119
  %173 = vmatprep.subr.mxu0 0.0
  %174 = vmatpush2.msra.mxu0 0.0
  %175 = vmatprep.subr.mxu0 0.0
  %176 = vmatpush2.msra.mxu0 0.0
  %177 = vmatprep.subr.mxu0 0.0
  %178 = vmatpush2.msra.mxu0 0.0
  %179 = vmatprep.subr.mxu0 0.0
  %180 = vmatpush2.msra.mxu0 0.0
  %181 = vmatprep.subr.mxu0 0.0
  %182 = vmatpush2.msra.mxu0 0.0
  %183 = vmatprep.subr.mxu0 0.0
  %184 = vmatpush2.msra.mxu0 0.0
  %185 = vmatprep.subr.mxu0 0.0
  %186 = vmatpush2.msra.mxu0 0.0
  %187 = vmatprep.subr.mxu0 0.0
  %188 = vmatpush2.msra.mxu0 0.0
  %189 = vmatprep.subr.mxu0 0.0
  %190 = vmatpush2.msra.mxu0 0.0
  %191 = vmatprep.subr.mxu0 0.0
  %192 = vmatpush2.msra.mxu0 0.0
  %193 = vmatprep.subr.mxu0 0.0
  %194 = vmatpush2.msra.mxu0 0.0
  %195 = vmatprep.subr.mxu0 0.0
  %196 = vmatpush2.msra.mxu0 0.0
  %197 = vmatprep.subr.mxu0 0.0
  %198 = vmatpush2.msra.mxu0 0.0
  %199 = vmatprep.subr.mxu0 0.0
  %200 = vmatpush2.msra.mxu0 0.0
  %201 = vmatprep.subr.mxu0 0.0
  %202 = vmatpush2.msra.mxu0 0.0
  %203 = vmatprep.subr.mxu0 0.0
  %204 = vmatpush2.msra.mxu0 0.0
  %205 = vmatprep.mubr.f32.mxu0 0.0
  %206 = vmatmul.mubr.f32.gmra.mxu0 %v136
  %v207 = vpop.f32.mrf.mxu0
  %v208 = vadd.f32 %v132, %v207
  %v209 = vpop.f32.mrf.mxu0
  %210 = vmatprep.mubr.f32.mxu0 0.0
  %211 = vmatmul.mubr.f32.gmra.mxu0 %v139
  %v212 = vpop.f32.mrf.mxu0
  %v213 = vadd.f32 %v132, %v212
  %v214 = vpop.f32.mrf.mxu0
  %215 = vdwg.mxu0
  %vm216 = vcmask 7168
  %217 = vst.msk [vmem:[%s5] sm:$0xff] %vm216, %v208
  %218 = vst.msk [vmem:[%s5 + $0x8] sm:$0xff] %vm216, %v213
  // Predicated region
  $region22: #{tpu_custom_call.1} parent=0 // pred_check
    _
  $region23: #{tpu_custom_call.1} parent=0 // pred_check_branch
    %220 = sbr.rel (0) target = $region25
  $region24: #{tpu_custom_call.1} parent=0 // pred_region
    _
  $region25: #{tpu_custom_call.1} parent=0 // pred_fallthru
    _
  // Predicated region
  $region26: #{tpu_custom_call.1} parent=0 // pred_check
    _
  $region27: #{tpu_custom_call.1} parent=0 // pred_check_branch
    %222 = sbr.rel (0) target = $region29
  $region28: #{tpu_custom_call.1} parent=0 // pred_region
    _
  $region29: #{tpu_custom_call.1} parent=0 // pred_fallthru
    _

</llo_original>
